<compile_context>
chip_gen: v5e
topology: v5e:2x2
jax: 0.10.0
libtpu: 0.0.40
codegen_flags: <defaults>
</compile_context>

<pallas_src>
import functools

import jax
import jax.numpy as jnp
from jax.experimental import pallas as pl
from jax.experimental.pallas import tpu as pltpu


def _elu(x):
    return jnp.where(x > 0.0, x, jnp.exp(x) - 1.0)


def actor_critic_kernel(
    obs_ref,                       # [TB, D]       f32
    gum_ref,                       # [TB, HEAD_W]  f32 Gumbel noise
    w1_ref, b1_ref,                # fused layer 1   (bf16 W, f32 b)
    w2_ref, b2_ref,                # fused layer 2 (block-diag)
    wh_ref, bh_ref,                # fused lane-padded head
    out_ref,                       # [TB, HEAD_W]  f32 packed output slab
    *, num_actions: int,
):
    obs = obs_ref[...].astype(jnp.bfloat16)

    # Both encoders in one pass: columns [0:H] = actor, [H:2H] = critic.
    h = _elu(jnp.dot(obs, w1_ref[...], preferred_element_type=jnp.float32) + b1_ref[...])
    h = _elu(jnp.dot(h.astype(jnp.bfloat16), w2_ref[...],
                     preferred_element_type=jnp.float32) + b2_ref[...])

    # Fused head: logits in cols [0:A] (actor rows), value in col A (critic rows),
    # zero padding out to a lane-dense multiple of 128.
    head = (jnp.dot(h.astype(jnp.bfloat16), wh_ref[...],
                    preferred_element_type=jnp.float32) + bh_ref[...])

    tb, w = head.shape
    lane = jax.lax.broadcasted_iota(jnp.int32, (tb, w), 1)
    is_action = lane < num_actions
    neg_inf = jnp.float32(-jnp.inf)

    # log-softmax over the action columns only
    logits = jnp.where(is_action, head, neg_inf)
    m = jnp.max(logits, axis=-1, keepdims=True)
    lse = m + jnp.log(jnp.sum(jnp.exp(logits - m), axis=-1, keepdims=True))
    log_probs = logits - lse

    # Categorical sampling via Gumbel-max (noise precomputed outside the kernel).
    y = jnp.where(is_action, log_probs + gum_ref[...], neg_inf)
    ymax = jnp.max(y, axis=-1, keepdims=True)
    action = jnp.min(jnp.where(y >= ymax, lane, w), axis=-1, keepdims=True)  # first argmax
    logp = jnp.sum(jnp.where(lane == action, log_probs, 0.0), axis=-1, keepdims=True)

    # Single lane-dense packed output slab:
    #   lanes [0:A] raw logits, lane A value (already in head), A+1 log_prob, A+2 action.
    out_ref[...] = jnp.where(
        lane == num_actions + 1, logp,
        jnp.where(lane == num_actions + 2, action.astype(jnp.float32), head))


def _pick_batch_tile(batch: int) -> int:
    # Largest tile (<=1024, multiple of 8) that divides the batch; fall back to whole batch.
    for tb in (1024, 512, 256, 128, 64, 32, 16, 8):
        if batch % tb == 0:
            return tb
    return batch


@functools.partial(jax.jit, static_argnames=("num_actions",))
def actor_critic_forward(params, obs, rnn_states, rng_key, *, num_actions):
    B, D = obs.shape
    head_w = params["wh"].shape[1]   # lane-padded head width (logits | value | logp | action)
    tb = _pick_batch_tile(B)
    grid = (B // tb,)

    # TODO(synk): TPU hardware PRNG (pltpu.prng_seed) has no CPU/interpret lowering, so the
    # Gumbel noise is generated with jax.random here and streamed into the kernel.
    gumbel = jax.random.gumbel(rng_key, (B, head_w), jnp.float32)

    def row_spec(width):
        return pl.BlockSpec((tb, width), lambda i: (i, 0))

    def resident_spec(arr):
        return pl.BlockSpec(arr.shape, lambda i: (0, 0))   # VMEM-resident across grid

    kernel = functools.partial(actor_critic_kernel, num_actions=num_actions)

    out = pl.pallas_call(
        kernel,
        out_shape=jax.ShapeDtypeStruct((B, head_w), jnp.float32),
        grid=grid,
        in_specs=[
            row_spec(D), row_spec(head_w),
            resident_spec(params["w1"]), resident_spec(params["b1"]),
            resident_spec(params["w2"]), resident_spec(params["b2"]),
            resident_spec(params["wh"]), resident_spec(params["bh"]),
        ],
        out_specs=row_spec(head_w),
        compiler_params=pltpu.CompilerParams(
            dimension_semantics=("parallel",),          # batch tiles shard across v7x TCs
            vmem_limit_bytes=48 * 1024 * 1024,
        ),
    )(
        obs, gumbel,
        params["w1"], params["b1"], params["w2"], params["b2"],
        params["wh"], params["bh"],
    )

    A = num_actions
    # TensorDict-equivalent output; squeezes mirror .squeeze() in the PyTorch module.
    return {
        "values": out[:, A],                          # [B]
        "action_logits": out[:, :A],                  # [B, A]
        "actions": out[:, A + 2].astype(jnp.int32),   # [B] (int32; torch uses int64)
        "log_prob_actions": out[:, A + 1],            # [B]
        "new_rnn_states": rnn_states,                 # passthrough (_core_empty)
    }


def make_params(key, obs_dim, hidden, num_actions):
    ks = jax.random.split(key, 6)

    def lin(k, fan_in, fan_out):
        # deterministic synthetic init (zero biases, matching initialize_weights)
        w = jax.random.normal(k, (fan_in, fan_out), jnp.float32) / jnp.sqrt(float(fan_in))
        b = jnp.zeros((1, fan_out), jnp.float32)
        return w, b

    w1a, b1a = lin(ks[0], obs_dim, hidden)
    w2a, b2a = lin(ks[1], hidden, hidden)
    w1c, b1c = lin(ks[2], obs_dim, hidden)
    w2c, b2c = lin(ks[3], hidden, hidden)
    wv, bv = lin(ks[4], hidden, 1)              # critic_linear
    wp, bp = lin(ks[5], hidden, num_actions)    # action parameterization (logits)

    # Lane-padded head width: logits | value | log_prob | action, padded to 128 multiple.
    head_w = 128 * ((num_actions + 3 + 127) // 128)

    # Fused layer 1: columns [actor | critic].
    w1 = jnp.concatenate([w1a, w1c], axis=1)
    b1 = jnp.concatenate([b1a, b1c], axis=1)

    # Fused layer 2: block-diagonal so the two branches stay independent.
    w2 = (jnp.zeros((2 * hidden, 2 * hidden), jnp.float32)
          .at[:hidden, :hidden].set(w2a)
          .at[hidden:, hidden:].set(w2c))
    b2 = jnp.concatenate([b2a, b2c], axis=1)

    # Fused head: actor rows -> cols [0:A], critic rows -> col A.
    wh = (jnp.zeros((2 * hidden, head_w), jnp.float32)
          .at[:hidden, :num_actions].set(wp)
          .at[hidden:, num_actions].set(wv[:, 0]))
    bh = (jnp.zeros((1, head_w), jnp.float32)
          .at[:, :num_actions].set(bp)
          .at[:, num_actions].set(bv[:, 0]))

    bf16 = lambda x: x.astype(jnp.bfloat16)
    return dict(w1=bf16(w1), b1=b1, w2=bf16(w2), b2=b2, wh=bf16(wh), bh=bh)


if __name__ == "__main__":
    B, D, H, A = 4, 16, 32, 6
    key = jax.random.PRNGKey(0)
    k_obs, k_rnn, k_par, k_sample = jax.random.split(key, 4)

    obs = jax.random.normal(k_obs, (B, D), jnp.float32)              # normalized obs
    rnn_states = jax.random.normal(k_rnn, (B, 2 * H), jnp.float32)   # fake rnn states (FF case)
    params = make_params(k_par, D, H, A)

    result = actor_critic_forward(params, obs, rnn_states, k_sample, num_actions=A)
    jax.block_until_ready(result)

    assert result["values"].shape == (B,)
    assert result["action_logits"].shape == (B, A)
    assert result["actions"].shape == (B,)
    assert result["log_prob_actions"].shape == (B,)
    assert result["new_rnn_states"].shape == (B, 2 * H)
    assert bool(jnp.all((result["actions"] >= 0) & (result["actions"] < A)))
    assert bool(jnp.all(result["log_prob_actions"] <= 0.0))

    print("KERNEL_OK")
</pallas_src>

<mosaic_0001>
module attributes {stable_mosaic.version = 11 : i64} {
  func.func @actor_critic_kernel(%arg0: i32, %arg1: memref<4x16xf32, #tpu.memory_space<vmem>>, %arg2: memref<4x128xf32, #tpu.memory_space<vmem>>, %arg3: memref<16x64xbf16, #tpu.memory_space<vmem>>, %arg4: memref<1x64xf32, #tpu.memory_space<vmem>>, %arg5: memref<64x64xbf16, #tpu.memory_space<vmem>>, %arg6: memref<1x64xf32, #tpu.memory_space<vmem>>, %arg7: memref<64x128xbf16, #tpu.memory_space<vmem>>, %arg8: memref<1x128xf32, #tpu.memory_space<vmem>>, %arg9: memref<4x128xf32, #tpu.memory_space<vmem>>) attributes {dimension_semantics = [#tpu.dimension_semantics<parallel>], iteration_bounds = array<i64: 1>, scalar_prefetch = 0 : i64, scratch_operands = 0 : i64, tpu.core_type = #tpu.core_type<tc>, window_params = [{transform_indices = @transform_0, window_bounds = array<i64: 4, 16>}, {transform_indices = @transform_1, window_bounds = array<i64: 4, 128>}, {pipeline_mode = #tpu.pipeline_mode<synchronous>, transform_indices = @transform_2, window_bounds = array<i64: 16, 64>}, {pipeline_mode = #tpu.pipeline_mode<synchronous>, transform_indices = @transform_3, window_bounds = array<i64: 1, 64>}, {pipeline_mode = #tpu.pipeline_mode<synchronous>, transform_indices = @transform_4, window_bounds = array<i64: 64, 64>}, {pipeline_mode = #tpu.pipeline_mode<synchronous>, transform_indices = @transform_5, window_bounds = array<i64: 1, 64>}, {pipeline_mode = #tpu.pipeline_mode<synchronous>, transform_indices = @transform_6, window_bounds = array<i64: 64, 128>}, {pipeline_mode = #tpu.pipeline_mode<synchronous>, transform_indices = @transform_7, window_bounds = array<i64: 1, 128>}, {transform_indices = @transform_8, window_bounds = array<i64: 4, 128>}]} {
    %c0 = arith.constant 0 : index
    %c0_0 = arith.constant 0 : index
    %0 = vector.load %arg1[%c0, %c0_0] : memref<4x16xf32, #tpu.memory_space<vmem>>, vector<4x16xf32>
    %1 = arith.truncf %0 : vector<4x16xf32> to vector<4x16xbf16>
    %c0_1 = arith.constant 0 : index
    %c0_2 = arith.constant 0 : index
    %2 = vector.load %arg3[%c0_1, %c0_2] : memref<16x64xbf16, #tpu.memory_space<vmem>>, vector<16x64xbf16>
    %cst = arith.constant dense<0.000000e+00> : vector<4x64xf32>
    %3 = tpu.matmul %1, %2, %cst {dimension_numbers = #tpu.dot_dimension_numbers<[1], [0], [0], [1], [0, 0, 1, 1], [], []>} : vector<4x16xbf16>, vector<16x64xbf16>, vector<4x64xf32> -> vector<4x64xf32>
    %c0_3 = arith.constant 0 : index
    %c0_4 = arith.constant 0 : index
    %4 = vector.load %arg4[%c0_3, %c0_4] : memref<1x64xf32, #tpu.memory_space<vmem>>, vector<1x64xf32>
    %5 = vector.broadcast %4 : vector<1x64xf32> to vector<4x64xf32>
    %6 = arith.addf %3, %5 : vector<4x64xf32>
    %cst_5 = arith.constant 0.000000e+00 : f32
    %7 = vector.broadcast %cst_5 : f32 to vector<4x64xf32>
    %8 = arith.cmpf ogt, %6, %7 : vector<4x64xf32>
    %9 = math.exp %6 : vector<4x64xf32>
    %cst_6 = arith.constant 1.000000e+00 : f32
    %10 = vector.broadcast %cst_6 : f32 to vector<4x64xf32>
    %11 = arith.subf %9, %10 : vector<4x64xf32>
    %12 = arith.select %8, %6, %11 : vector<4x64xi1>, vector<4x64xf32>
    %13 = arith.truncf %12 : vector<4x64xf32> to vector<4x64xbf16>
    %c0_7 = arith.constant 0 : index
    %c0_8 = arith.constant 0 : index
    %14 = vector.load %arg5[%c0_7, %c0_8] : memref<64x64xbf16, #tpu.memory_space<vmem>>, vector<64x64xbf16>
    %cst_9 = arith.constant dense<0.000000e+00> : vector<4x64xf32>
    %15 = tpu.matmul %13, %14, %cst_9 {dimension_numbers = #tpu.dot_dimension_numbers<[1], [0], [0], [1], [0, 0, 1, 1], [], []>} : vector<4x64xbf16>, vector<64x64xbf16>, vector<4x64xf32> -> vector<4x64xf32>
    %c0_10 = arith.constant 0 : index
    %c0_11 = arith.constant 0 : index
    %16 = vector.load %arg6[%c0_10, %c0_11] : memref<1x64xf32, #tpu.memory_space<vmem>>, vector<1x64xf32>
    %17 = vector.broadcast %16 : vector<1x64xf32> to vector<4x64xf32>
    %18 = arith.addf %15, %17 : vector<4x64xf32>
    %cst_12 = arith.constant 0.000000e+00 : f32
    %19 = vector.broadcast %cst_12 : f32 to vector<4x64xf32>
    %20 = arith.cmpf ogt, %18, %19 : vector<4x64xf32>
    %21 = math.exp %18 : vector<4x64xf32>
    %cst_13 = arith.constant 1.000000e+00 : f32
    %22 = vector.broadcast %cst_13 : f32 to vector<4x64xf32>
    %23 = arith.subf %21, %22 : vector<4x64xf32>
    %24 = arith.select %20, %18, %23 : vector<4x64xi1>, vector<4x64xf32>
    %25 = arith.truncf %24 : vector<4x64xf32> to vector<4x64xbf16>
    %c0_14 = arith.constant 0 : index
    %c0_15 = arith.constant 0 : index
    %26 = vector.load %arg7[%c0_14, %c0_15] : memref<64x128xbf16, #tpu.memory_space<vmem>>, vector<64x128xbf16>
    %cst_16 = arith.constant dense<0.000000e+00> : vector<4x128xf32>
    %27 = tpu.matmul %25, %26, %cst_16 {dimension_numbers = #tpu.dot_dimension_numbers<[1], [0], [0], [1], [0, 0, 1, 1], [], []>} : vector<4x64xbf16>, vector<64x128xbf16>, vector<4x128xf32> -> vector<4x128xf32>
    %c0_17 = arith.constant 0 : index
    %c0_18 = arith.constant 0 : index
    %28 = vector.load %arg8[%c0_17, %c0_18] : memref<1x128xf32, #tpu.memory_space<vmem>>, vector<1x128xf32>
    %29 = vector.broadcast %28 : vector<1x128xf32> to vector<4x128xf32>
    %30 = arith.addf %27, %29 : vector<4x128xf32>
    %31 = tpu.iota {dimensions = array<i32: 1>} : vector<4x128xi32>
    %c6_i32 = arith.constant 6 : i32
    %32 = vector.broadcast %c6_i32 : i32 to vector<4x128xi32>
    %33 = arith.cmpi slt, %31, %32 : vector<4x128xi32>
    %cst_19 = arith.constant 0xFF800000 : f32
    %34 = vector.broadcast %cst_19 : f32 to vector<4x128xf32>
    %35 = arith.select %33, %30, %34 : vector<4x128xi1>, vector<4x128xf32>
    %cst_20 = arith.constant dense<0xFF800000> : vector<4xf32>
    %36 = vector.multi_reduction <maximumf>, %35, %cst_20 [1] : vector<4x128xf32> to vector<4xf32>
    %37 = vector.shape_cast %36 : vector<4xf32> to vector<4x1xf32>
    %38 = vector.broadcast %37 : vector<4x1xf32> to vector<4x128xf32>
    %39 = arith.subf %35, %38 : vector<4x128xf32>
    %40 = math.exp %39 : vector<4x128xf32>
    %cst_21 = arith.constant dense<0.000000e+00> : vector<4xf32>
    %41 = vector.multi_reduction <add>, %40, %cst_21 [1] : vector<4x128xf32> to vector<4xf32>
    %42 = vector.shape_cast %41 : vector<4xf32> to vector<4x1xf32>
    %43 = math.log %42 : vector<4x1xf32>
    %44 = arith.addf %37, %43 : vector<4x1xf32>
    %45 = vector.broadcast %44 : vector<4x1xf32> to vector<4x128xf32>
    %46 = arith.subf %35, %45 : vector<4x128xf32>
    %c0_22 = arith.constant 0 : index
    %c0_23 = arith.constant 0 : index
    %47 = vector.load %arg2[%c0_22, %c0_23] : memref<4x128xf32, #tpu.memory_space<vmem>>, vector<4x128xf32>
    %48 = arith.addf %46, %47 : vector<4x128xf32>
    %cst_24 = arith.constant 0xFF800000 : f32
    %49 = vector.broadcast %cst_24 : f32 to vector<4x128xf32>
    %50 = arith.select %33, %48, %49 : vector<4x128xi1>, vector<4x128xf32>
    %cst_25 = arith.constant dense<0xFF800000> : vector<4xf32>
    %51 = vector.multi_reduction <maximumf>, %50, %cst_25 [1] : vector<4x128xf32> to vector<4xf32>
    %52 = vector.shape_cast %51 : vector<4xf32> to vector<4x1xf32>
    %53 = vector.broadcast %52 : vector<4x1xf32> to vector<4x128xf32>
    %54 = arith.cmpf oge, %50, %53 : vector<4x128xf32>
    %c128_i32 = arith.constant 128 : i32
    %55 = vector.broadcast %c128_i32 : i32 to vector<4x128xi32>
    %56 = arith.select %54, %31, %55 : vector<4x128xi1>, vector<4x128xi32>
    %cst_26 = arith.constant dense<2147483647> : vector<4xi32>
    %57 = vector.multi_reduction <minsi>, %56, %cst_26 [1] : vector<4x128xi32> to vector<4xi32>
    %58 = vector.shape_cast %57 : vector<4xi32> to vector<4x1xi32>
    %59 = vector.broadcast %58 : vector<4x1xi32> to vector<4x128xi32>
    %60 = arith.cmpi eq, %31, %59 : vector<4x128xi32>
    %cst_27 = arith.constant 0.000000e+00 : f32
    %61 = vector.broadcast %cst_27 : f32 to vector<4x128xf32>
    %62 = arith.select %60, %46, %61 : vector<4x128xi1>, vector<4x128xf32>
    %cst_28 = arith.constant dense<0.000000e+00> : vector<4xf32>
    %63 = vector.multi_reduction <add>, %62, %cst_28 [1] : vector<4x128xf32> to vector<4xf32>
    %64 = vector.shape_cast %63 : vector<4xf32> to vector<4x1xf32>
    %c7_i32 = arith.constant 7 : i32
    %65 = vector.broadcast %c7_i32 : i32 to vector<4x128xi32>
    %66 = arith.cmpi eq, %31, %65 : vector<4x128xi32>
    %c8_i32 = arith.constant 8 : i32
    %67 = vector.broadcast %c8_i32 : i32 to vector<4x128xi32>
    %68 = arith.cmpi eq, %31, %67 : vector<4x128xi32>
    %69 = arith.sitofp %58 : vector<4x1xi32> to vector<4x1xf32>
    %70 = vector.shape_cast %69 : vector<4x1xf32> to vector<4x1xf32>
    %71 = vector.broadcast %70 : vector<4x1xf32> to vector<4x128xf32>
    %72 = arith.select %68, %71, %30 : vector<4x128xi1>, vector<4x128xf32>
    %73 = vector.shape_cast %64 : vector<4x1xf32> to vector<4x1xf32>
    %74 = vector.broadcast %73 : vector<4x1xf32> to vector<4x128xf32>
    %75 = arith.select %66, %74, %72 : vector<4x128xi1>, vector<4x128xf32>
    %c0_29 = arith.constant 0 : index
    %c0_30 = arith.constant 0 : index
    %76 = vector.load %arg9[%c0_29, %c0_30] : memref<4x128xf32, #tpu.memory_space<vmem>>, vector<4x128xf32>
    tpu.vector_store %arg9[%c0_29, %c0_30], %75 {strides = array<i32>} : memref<4x128xf32, #tpu.memory_space<vmem>>, vector<4x128xf32>,
    return
  }
  func.func @transform_0(%arg0: i32) -> (i32, i32) {
    %c0_i32 = arith.constant 0 : i32
    %c0_i32_0 = arith.constant 0 : i32
    return %arg0, %c0_i32 : i32, i32
  }
  func.func @transform_1(%arg0: i32) -> (i32, i32) {
    %c0_i32 = arith.constant 0 : i32
    %c0_i32_0 = arith.constant 0 : i32
    return %arg0, %c0_i32 : i32, i32
  }
  func.func @transform_2(%arg0: i32) -> (i32, i32) {
    %c0_i32 = arith.constant 0 : i32
    %c0_i32_0 = arith.constant 0 : i32
    %c0_i32_1 = arith.constant 0 : i32
    return %c0_i32, %c0_i32_0 : i32, i32
  }
  func.func @transform_3(%arg0: i32) -> (i32, i32) {
    %c0_i32 = arith.constant 0 : i32
    %c0_i32_0 = arith.constant 0 : i32
    %c0_i32_1 = arith.constant 0 : i32
    return %c0_i32, %c0_i32_0 : i32, i32
  }
  func.func @transform_4(%arg0: i32) -> (i32, i32) {
    %c0_i32 = arith.constant 0 : i32
    %c0_i32_0 = arith.constant 0 : i32
    %c0_i32_1 = arith.constant 0 : i32
    return %c0_i32, %c0_i32_0 : i32, i32
  }
  func.func @transform_5(%arg0: i32) -> (i32, i32) {
    %c0_i32 = arith.constant 0 : i32
    %c0_i32_0 = arith.constant 0 : i32
    %c0_i32_1 = arith.constant 0 : i32
    return %c0_i32, %c0_i32_0 : i32, i32
  }
  func.func @transform_6(%arg0: i32) -> (i32, i32) {
    %c0_i32 = arith.constant 0 : i32
    %c0_i32_0 = arith.constant 0 : i32
    %c0_i32_1 = arith.constant 0 : i32
    return %c0_i32, %c0_i32_0 : i32, i32
  }
  func.func @transform_7(%arg0: i32) -> (i32, i32) {
    %c0_i32 = arith.constant 0 : i32
    %c0_i32_0 = arith.constant 0 : i32
    %c0_i32_1 = arith.constant 0 : i32
    return %c0_i32, %c0_i32_0 : i32, i32
  }
  func.func @transform_8(%arg0: i32) -> (i32, i32) {
    %c0_i32 = arith.constant 0 : i32
    %c0_i32_0 = arith.constant 0 : i32
    return %arg0, %c0_i32 : i32, i32
  }
}

</mosaic_0001>

<llo_original>
// kernel: actor_critic_forward.1
$region0: #{actor_critic_forward.1}
  #allocation0 [shape = 'u32[]', space=smem, size = 0x4, offset = 0x4, fixed_abs, tag = 'smem constant byte address 0x4 - core index']
  #allocation1 [shape = 'u32[72,128]{1,0:T(1,128)}', space=vmem, size = 0x9000, scoped, tag = 'internal scratch']
  %s0 = inlined_call_operand.vmem [shape: f32[4,16], index: 0, kind: input, shape index: {}]
  %s1 = inlined_call_operand.vmem [shape: f32[4,128], index: 1, kind: input, shape index: {}]
  %s2 = inlined_call_operand.vmem [shape: bf16[16,64], index: 2, kind: input, shape index: {}]
  %s3 = inlined_call_operand.vmem [shape: f32[1,64], index: 3, kind: input, shape index: {}]
  %s4 = inlined_call_operand.hbm [shape: bf16[64,64], index: 4, kind: input, shape index: {}]
  %s5 = inlined_call_operand.vmem [shape: f32[1,64], index: 5, kind: input, shape index: {}]
  %s6 = inlined_call_operand.hbm [shape: bf16[64,128], index: 6, kind: input, shape index: {}]
  %s7 = inlined_call_operand.vmem [shape: f32[1,128], index: 7, kind: input, shape index: {}]
  %s8 = inlined_call_operand.vmem [shape: f32[4,128], index: 8, kind: output, shape index: {}]
  %s9 = sld [smem:[#allocation0]]
  $region50: #{actor_critic_forward.1} parent=0
    _
  %s11 = ssub.s32 1, %s9
  %s12 = scalar_select 0, %s11, %s9
  $region1: #{actor_critic_forward.1} parent=0
    #allocation2 [shape = 'u8[16384]{0}', space=vmem, size = 0x4000, scoped, tag = 'input window, operand 4, single buffered']
    #allocation3 [shape = 's32[1]{0}', space=sflag, size = 0x4, scoped, tag = 'scoped memory for actor_critic_forward.1']
    #allocation4 [shape = 'u8[16384]{0}', space=vmem, size = 0x4000, scoped, tag = 'input window, operand 6, single buffered']
    #allocation5 [shape = 's32[1]{0}', space=sflag, size = 0x4, scoped, tag = 'scoped memory for actor_critic_forward.1']
    %13 = vsyncpa [#allocation3], 0
    %14 = vsyncpa [#allocation5], 0
    // Predicated region
    $region2: #{actor_critic_forward.1} parent=1 // pred_check
      _
    $region3: #{actor_critic_forward.1} parent=1 // pred_check_branch
      %16 = sbr.rel (0) target = $region5
    $region4: #{actor_critic_forward.1} parent=1 // pred_region
      _
    $region5: #{actor_critic_forward.1} parent=1 // pred_fallthru
      _
    // Predicated region
    $region6: #{actor_critic_forward.1} parent=1 // pred_check
      _
    $region7: #{actor_critic_forward.1} parent=1 // pred_check_branch
      %18 = sbr.rel (0) target = $region9
    $region8: #{actor_critic_forward.1} parent=1 // pred_region
      _
    $region9: #{actor_critic_forward.1} parent=1 // pred_fallthru
      _
    // Predicated region
    $region10: #{actor_critic_forward.1} parent=1 // pred_check
      _
    $region11: #{actor_critic_forward.1} parent=1 // pred_check_branch
      %20 = sbr.rel (0) target = $region13
    $region12: #{actor_critic_forward.1} parent=1 // pred_region
      _
    $region13: #{actor_critic_forward.1} parent=1 // pred_fallthru
      _
    // Predicated region
    $region14: #{actor_critic_forward.1} parent=1 // pred_check
      _
    $region15: #{actor_critic_forward.1} parent=1 // pred_check_branch
      %22 = sbr.rel (0) target = $region17
    $region16: #{actor_critic_forward.1} parent=1 // pred_region
      _
    $region17: #{actor_critic_forward.1} parent=1 // pred_fallthru
      _
    // Predicated region
    $region18: #{actor_critic_forward.1} parent=1 // pred_check
      _
    $region19: #{actor_critic_forward.1} parent=1 // pred_check_branch
      %24 = sbr.rel (0) target = $region21
    $region20: #{actor_critic_forward.1} parent=1 // pred_region
      %26 = vsyncadd [#allocation3], 0
      %s27 = sshll.u32 %s4, 4
      %s28 = int_to_ptr.hbm [resolvable:$true] %s27
      %s29 = sshll.u32 [#allocation2], 4
      %s30 = int_to_ptr.vmem [resolvable:$true] %s29
      %35 = dma.hbm_to_vmem [thread:$0]  %s28, 512, %s30, [#allocation3], 64, 64, 4
    $region21: #{actor_critic_forward.1} parent=1 // pred_fallthru
      _
    // Predicated region
    $region22: #{actor_critic_forward.1} parent=1 // pred_check
      _
    $region23: #{actor_critic_forward.1} parent=1 // pred_check_branch
      %37 = sbr.rel (0) target = $region25
    $region24: #{actor_critic_forward.1} parent=1 // pred_region
      _
    $region25: #{actor_critic_forward.1} parent=1 // pred_fallthru
      _
    // Predicated region
    $region26: #{actor_critic_forward.1} parent=1 // pred_check
      _
    $region27: #{actor_critic_forward.1} parent=1 // pred_check_branch
      %39 = sbr.rel (0) target = $region29
    $region28: #{actor_critic_forward.1} parent=1 // pred_region
      %41 = vsyncadd [#allocation5], 0
      %s42 = sshll.u32 %s6, 4
      %s43 = int_to_ptr.hbm [resolvable:$true] %s42
      %s44 = sshll.u32 [#allocation4], 4
      %s45 = int_to_ptr.vmem [resolvable:$true] %s44
      %50 = dma.hbm_to_vmem [thread:$0]  %s43, 512, %s45, [#allocation5], 64, 64, 4
    $region29: #{actor_critic_forward.1} parent=1 // pred_fallthru
      _
    // Predicated region
    $region30: #{actor_critic_forward.1} parent=1 // pred_check
      _
    $region31: #{actor_critic_forward.1} parent=1 // pred_check_branch
      %52 = sbr.rel (0) target = $region33
    $region32: #{actor_critic_forward.1} parent=1 // pred_region
      _
    $region33: #{actor_critic_forward.1} parent=1 // pred_fallthru
      _
    // Predicated region
    $region34: #{actor_critic_forward.1} parent=1 // pred_check
      _
    $region35: #{actor_critic_forward.1} parent=1 // pred_check_branch
      %54 = sbr.rel (0) target = $region37
    $region36: #{actor_critic_forward.1} parent=1 // pred_region
      %56 = dma.done [#allocation3], 512
    $region37: #{actor_critic_forward.1} parent=1 // pred_fallthru
      _
    // Predicated region
    $region38: #{actor_critic_forward.1} parent=1 // pred_check
      _
    $region39: #{actor_critic_forward.1} parent=1 // pred_check_branch
      %58 = sbr.rel (0) target = $region41
    $region40: #{actor_critic_forward.1} parent=1 // pred_region
      %60 = dma.done [#allocation5], 512
    $region41: #{actor_critic_forward.1} parent=1 // pred_fallthru
      _
    %v62 = vld [vmem:[%s0] sm:$0xf]
    %v63 = vpack.c.bf16 %v62, %v62
    %v64 = vld [vmem:[%s2] sm:$0xf]
    %v65 = vld [vmem:[%s2 + $0x4] sm:$0xf]
    %v66 = vld [vmem:[%s3] sm:$0x1]
    %v68 = vperm.slane %v66, 0
    %v72 = vunpack.c.l.b16 %v64
    %v73 = vunpack.c.l.b16 %v65
    %v74 = vpack.c.b16 %v73, %v72
    %vm76 = vcmask 130048
    %v78 = vsel %vm76, %v63, 0
    %80 = vmatpush.bf16.msra.mxu0 0
    %81 = vmatpush.bf16.msra.mxu0 0
    %82 = vmatpush.bf16.msra.mxu0 0
    %83 = vmatpush.bf16.msra.mxu0 0
    %84 = vmatpush.bf16.msra.mxu0 0
    %85 = vmatpush.bf16.msra.mxu0 0
    %86 = vmatpush.bf16.msra.mxu0 0
    %87 = vmatpush.bf16.msra.mxu0 %v74
    %88 = vmatmul.bf16.gmra.mxu0 %v78
    %v89 = vpop.f32.mrf.mxu0
    %v90 = vadd.f32 %v68, %v89
    %v91 = vpop.f32.mrf.mxu0
    %92 = vdwg.mxu0
    %vm93 = vcmp.gt.f32.partialorder %v90, 0.0
    %v94 = vmul.f32 %v90, 1.442695
    %v95 = vpow.pop %v94
    %v96 = vsub.f32 %v95, 1.0
    %v97 = vsel %vm93, %v90, %v96
    %v98 = vpack.c.bf16 %v97, %v97
    %v99 = vld [vmem:[#allocation2] sm:$0xf]
    %v100 = vld [vmem:[#allocation2 + $0x4] sm:$0xf]
    %v101 = vld [vmem:[#allocation2 + $0x8] sm:$0xf]
    %v102 = vld [vmem:[#allocation2 + $0xc] sm:$0xf]
    %v103 = vld [vmem:[#allocation2 + $0x10] sm:$0xf]
    %v104 = vld [vmem:[#allocation2 + $0x14] sm:$0xf]
    %v105 = vld [vmem:[#allocation2 + $0x18] sm:$0xf]
    %v106 = vld [vmem:[#allocation2 + $0x1c] sm:$0xf]
    %v107 = vld [vmem:[%s5] sm:$0x1]
    %v109 = vperm.slane %v107, 0
    %v119 = vunpack.c.l.b16 %v99
    %v120 = vunpack.c.l.b16 %v100
    %v121 = vunpack.c.l.b16 %v101
    %v122 = vunpack.c.l.b16 %v102
    %v123 = vunpack.c.l.b16 %v103
    %v124 = vunpack.c.l.b16 %v104
    %v125 = vunpack.c.l.b16 %v105
    %v126 = vunpack.c.l.b16 %v106
    %v127 = vpack.c.b16 %v120, %v119
    %v128 = vpack.c.b16 %v122, %v121
    %v129 = vpack.c.b16 %v124, %v123
    %v130 = vpack.c.b16 %v126, %v125
    %vm135 = vcmask 523264
    %v137 = vsel %vm135, %v98, 0
    %139 = vmatpush.bf16.msra.mxu0 0
    %140 = vmatpush.bf16.msra.mxu0 0
    %141 = vmatpush.bf16.msra.mxu0 0
    %142 = vmatpush.bf16.msra.mxu0 0
    %143 = vmatpush.bf16.msra.mxu0 %v130
    %144 = vmatpush.bf16.msra.mxu0 %v129
    %145 = vmatpush.bf16.msra.mxu0 %v128
    %146 = vmatpush.bf16.msra.mxu0 %v127
    %147 = vmatmul.bf16.gmra.mxu0 %v137
    %v148 = vpop.f32.mrf.mxu0
    %v149 = vadd.f32 %v109, %v148
    %v150 = vpop.f32.mrf.mxu0
    %151 = vdwg.mxu0
    %vm152 = vcmp.gt.f32.partialorder %v149, 0.0
    %v153 = vmul.f32 %v149, 1.442695
    %v154 = vpow.pop %v153
    %v155 = vsub.f32 %v154, 1.0
    %v156 = vsel %vm152, %v149, %v155
    %v157 = vpack.c.bf16 %v156, %v156
    %v158 = vld [vmem:[#allocation4] sm:$0xf]
    %v159 = vld [vmem:[#allocation4 + $0x4] sm:$0xf]
    %v160 = vld [vmem:[#allocation4 + $0x8] sm:$0xf]
    %v161 = vld [vmem:[#allocation4 + $0xc] sm:$0xf]
    %v162 = vld [vmem:[#allocation4 + $0x10] sm:$0xf]
    %v163 = vld [vmem:[#allocation4 + $0x14] sm:$0xf]
    %v164 = vld [vmem:[#allocation4 + $0x18] sm:$0xf]
    %v165 = vld [vmem:[#allocation4 + $0x1c] sm:$0xf]
    %v166 = vld [vmem:[%s7] sm:$0x1]
    %v168 = vperm.slane %v166, 0
    %v178 = vunpack.c.l.b16 %v158
    %v179 = vunpack.c.l.b16 %v159
    %v180 = vunpack.c.l.b16 %v160
    %v181 = vunpack.c.l.b16 %v161
    %v182 = vunpack.c.l.b16 %v162
    %v183 = vunpack.c.l.b16 %v163
    %v184 = vunpack.c.l.b16 %v164
    %v185 = vunpack.c.l.b16 %v165
    %v186 = vpack.c.b16 %v179, %v178
    %v187 = vpack.c.b16 %v181, %v180
    %v188 = vpack.c.b16 %v183, %v182
    %v189 = vpack.c.b16 %v185, %v184
    %v195 = vsel %vm135, %v157, 0
    %197 = vmatpush.bf16.msra.mxu0 0
    %198 = vmatpush.bf16.msra.mxu0 0
    %199 = vmatpush.bf16.msra.mxu0 0
    %200 = vmatpush.bf16.msra.mxu0 0
    %201 = vmatpush.bf16.msra.mxu0 %v189
    %202 = vmatpush.bf16.msra.mxu0 %v188
    %203 = vmatpush.bf16.msra.mxu0 %v187
    %204 = vmatpush.bf16.msra.mxu0 %v186
    %205 = vmatmul.bf16.gmra.mxu0 %v195
    %v206 = vpop.f32.mrf.mxu0
    %v207 = vadd.f32 %v168, %v206
    %v208 = vpop.f32.mrf.mxu0
    %209 = vdwg.mxu0
    %v210 = vlaneseq
    %v211 = vand.u32 %v210, 127
    %vm212 = vcmp.lt.s32.totalorder %v211, 6
    %v213 = vsel %vm212, %v207, -inf
    %vm214 = vcmask 1043456
    %v215 = vsel %vm214, %v213, -inf
    %216 = vmax.xlane.f32.xlu0 %v215
    %v217 = vpop.xlane.xlu0 %216
    %v218 = vsub.f32 %v213, %v217
    %v219 = vmul.f32 %v218, 1.442695
    %v220 = vpow.pop %v219
    %v221 = vsel %vm214, %v220, 0.0
    %222 = vadd.xlane.f32.xlu0 %v221
    %v223 = vpop.xlane.xlu0 %222
    %v224 = vlog2.pop %v223
    %v225 = vmul.f32 %v224, 0.6931472
    %v226 = vadd.f32 %v217, %v225
    %v227 = vsub.f32 %v213, %v226
    %v228 = vld [vmem:[%s1] sm:$0xf]
    %v229 = vadd.f32 %v227, %v228
    %v230 = vsel %vm212, %v229, -inf
    %v231 = vsel %vm214, %v230, -inf
    %232 = vmax.xlane.f32.xlu0 %v231
    %v233 = vpop.xlane.xlu0 %232
    %vm234 = vcmp.ge.f32.partialorder %v230, %v233
    %v235 = vsel %vm234, %v211, 128
    %v236 = vsel %vm214, %v235, 2147483647
    %v237 = vand.u32 %v236, 65535
    %v238 = vshra.s32 %v236, 16
    %v239 = vcvt.s32.f32 %v237
    %v240 = vcvt.s32.f32 %v238
    %241 = vmin.xlane.f32.xlu0 %v240
    %v242 = vpop.xlane.xlu0 %241
    %vm243 = vcmp.eq.f32.partialorder %v240, %v242
    %v244 = vsel %vm243, %v239, inf
    %245 = vmin.xlane.f32.xlu0 %v244
    %v246 = vpop.xlane.xlu0 %245
    %v247 = vcvt.f32.s32 %v246
    %v248 = vcvt.f32.s32 %v242
    %v249 = vshll.u32 %v248, 16
    %v250 = vadd.s32 %v249, %v247
    %vm251 = vcmp.eq.s32.totalorder %v211, %v250
    %v252 = vsel %vm251, %v227, 0.0
    %v253 = vsel %vm214, %v252, 0.0
    %254 = vadd.xlane.f32.xlu0 %v253
    %v255 = vpop.xlane.xlu0 %254
    %vm256 = vcmp.eq.s32.totalorder %v211, 7
    %vm257 = vcmp.eq.s32.totalorder %v211, 8
    %v258 = vcvt.s32.f32 %v250
    %v259 = vsel %vm257, %v258, %v207
    %v260 = vsel %vm256, %v255, %v259
    %261 = vst [vmem:[%s8] sm:$0xf] %v260
    // Predicated region
    $region42: #{actor_critic_forward.1} parent=1 // pred_check
      _
    $region43: #{actor_critic_forward.1} parent=1 // pred_check_branch
      %263 = sbr.rel (0) target = $region45
    $region44: #{actor_critic_forward.1} parent=1 // pred_region
      _
    $region45: #{actor_critic_forward.1} parent=1 // pred_fallthru
      _
    // Predicated region
    $region46: #{actor_critic_forward.1} parent=1 // pred_check
      _
    $region47: #{actor_critic_forward.1} parent=1 // pred_check_branch
      %265 = sbr.rel (0) target = $region49
    $region48: #{actor_critic_forward.1} parent=1 // pred_region
      _
    $region49: #{actor_critic_forward.1} parent=1 // pred_fallthru
      _
    %266 = vsyncpa [#allocation3], 1
    %267 = vsyncpa [#allocation5], 1

</llo_original>
